<compile_context>
chip_gen: v7x
topology: tpu7x:2x2x1
jax: 0.10.0
libtpu: 0.0.40
codegen_flags: <defaults>
</compile_context>

<pallas_src>
import jax
import jax.numpy as jnp
from jax.experimental import pallas as pl
from jax.experimental.pallas import tpu as pltpu


def _mesh_probes_kernel(probes_ref, x_ref, o_ref):
    # probes_ref: (P, H)
    # x_ref     : (Bt, S, H)
    # o_ref     : (Bt, P, H) if H % 128 == 0 else (Bt, P*H)
    bt, s, h = x_ref.shape
    p = probes_ref.shape[0]

    x = x_ref[...]                                    # (Bt, S, H)
    probes = probes_ref[...].astype(x.dtype)          # (P, H)

    # ---- scores: one probe-stationary MXU matmul over the whole slab. ----
    # (Bt*S, H) @ (H, P): the tiny (H, P) weight is pushed to the MXU once per
    # grid step and all Bt*S rows stream through it (no per-batch weight
    # reloads, no Bt-way probe replication in vregs).
    x_flat = x.reshape(bt * s, h)
    scores_sp = jnp.dot(x_flat, probes.T,
                        preferred_element_type=jnp.float32)       # (Bt*S, P)

    # One XLU transpose of the per-batch (S, P) tiles so the softmax reduction
    # axis (seq) is the lane axis.  (P<8 pads to 8 sublanes => only a 2x cost
    # on the small elementwise volume, vs 32x lane padding in (Bt,S,P) layout.)
    scores = jnp.transpose(scores_sp.reshape(bt, s, p), (0, 2, 1))  # (Bt,P,S)

    # Numerically stable softmax over the sequence (lane) axis.
    # Exact divide: denom has only Bt*P elements, so the EUP approx reciprocal
    # buys nothing and would cost ~1e-3 relative error.
    m = jnp.max(scores, axis=-1, keepdims=True)
    e = jnp.exp(scores - m)
    attn = e / jnp.sum(e, axis=-1, keepdims=True)                   # (Bt,P,S)

    # ---- context: batched (P, S) @ (S, H) per batch row (inherently small M).
    ctx = jnp.einsum("bps,bsh->bph", attn.astype(x.dtype), x,
                     preferred_element_type=jnp.float32)            # (Bt,P,H)

    if len(o_ref.shape) == 3:
        # H is a 128 multiple: (Bt, P, H) is already lane-dense; whole store,
        # the wrapper reshape to (B, P*H) is free.
        o_ref[...] = ctx.astype(o_ref.dtype)
    else:
        # H < 128: fold probes into the lane axis so the output block is
        # lane-dense (P*H wide) and written with a single unmasked store.
        o_ref[...] = ctx.reshape(bt, p * h).astype(o_ref.dtype)


def _vmem_capacity_bytes():
    try:
        return int(pltpu.get_tpu_info().vmem_capacity_bytes)
    except Exception:
        return 64 * 1024 * 1024  # conservative fallback (v7x per-TC VMEM)


def _pick_block_batch(B, S, H, itemsize, slab_budget_bytes, min_steps=4):
    """Batch-block size: ~2-4 MiB x slabs, sublane-friendly, >= min_steps grid.

    Blocks smaller than the full batch are kept a multiple of 8 so the
    (bt, P*H) output block stays (8,128)-legal and sublane-dense.
    """
    per_batch = max(1, S * H * itemsize)
    bt = min(B, max(1, slab_budget_bytes // per_batch))
    if bt < B:
        bt = max(8, (bt // 8) * 8)
    # Prefer >= min_steps grid steps (compute/DMA overlap; 2 steps per
    # TensorCore under v7x megacore sharding) when the batch allows it.
    if pl.cdiv(B, bt) < min_steps:
        target = max(8, ((pl.cdiv(B, min_steps) + 7) // 8) * 8)
        if target < bt:
            bt = target
    return min(bt, B)


def mesh_probes(probes, x):
    """probes: (P, H), x: (B, S, H) -> (B, P*H)."""
    P, H = probes.shape
    B, S, Hx = x.shape
    assert H == Hx, "hidden size mismatch"

    itemsize = jnp.dtype(x.dtype).itemsize
    vmem_cap = _vmem_capacity_bytes()

    # The op is HBM-bound (AI ~ 4P/itemsize flop/byte); ~2-4 MiB blocks already
    # sit at ~85%+ of the HBM roofline, and bigger slabs only shorten the grid
    # and strain v7x's 64 MiB VMEM (2x x-slab + output + f32 intermediates).
    slab_budget = min(4 * 1024 * 1024, vmem_cap // 16)
    bt = _pick_block_batch(B, S, H, itemsize, slab_budget, min_steps=4)
    grid = (pl.cdiv(B, bt),)

    lane_dense_3d = (H % 128 == 0)
    if lane_dense_3d:
        out_shape = jax.ShapeDtypeStruct((B, P, H), x.dtype)
        out_spec = pl.BlockSpec((bt, P, H), lambda b: (b, 0, 0))
    else:
        out_shape = jax.ShapeDtypeStruct((B, P * H), x.dtype)
        out_spec = pl.BlockSpec((bt, P * H), lambda b: (b, 0))

    # Triple-buffer the x stream only where VMEM is plentiful (v5e/v6e,
    # 128 MiB) and there are enough grid steps for it to matter; v7x (64 MiB)
    # stays at the default double buffering.
    x_spec_kwargs = {}
    if vmem_cap >= 96 * 1024 * 1024 and grid[0] >= 3:
        x_spec_kwargs = dict(pipeline_mode=pl.Buffered(3))
    x_spec = pl.BlockSpec((bt, S, H), lambda b: (b, 0, 0), **x_spec_kwargs)

    cost = pl.CostEstimate(
        flops=4 * B * P * S * H,                              # two matmuls
        transcendentals=B * P * S,                            # softmax exp
        bytes_accessed=(B * S * H + B * P * H + P * H) * itemsize,
    )

    out = pl.pallas_call(
        _mesh_probes_kernel,
        out_shape=out_shape,
        grid_spec=pltpu.PrefetchScalarGridSpec(
            num_scalar_prefetch=0,
            grid=grid,
            in_specs=[
                pl.BlockSpec((P, H), lambda b: (0, 0)),       # probes (shared)
                x_spec,                                       # batch slab
            ],
            out_specs=out_spec,
        ),
        compiler_params=pltpu.CompilerParams(
            dimension_semantics=("parallel",),
            vmem_limit_bytes=min(vmem_cap // 2, 64 * 1024 * 1024),
        ),
        cost_estimate=cost,
    )(probes, x)

    if lane_dense_3d:
        out = out.reshape(B, P * H)
    return out


def mesh_probes_ref(probes, x):
    """Pure-JAX reference matching the PyTorch forward exactly (f32-accurate)."""
    B = x.shape[0]
    scores = jnp.einsum("ph,bsh->bps", probes, x,
                        precision=jax.lax.Precision.HIGHEST)
    attn = jax.nn.softmax(scores, axis=-1)
    ctx = jnp.einsum("bps,bsh->bph", attn, x,
                     precision=jax.lax.Precision.HIGHEST)
    return ctx.reshape(B, -1)


if __name__ == "__main__":
    batch = 2
    seq = 8
    hidden = 32
    n_probes = 4

    key = jax.random.PRNGKey(0)
    kx, kp = jax.random.split(key)

    x = jax.random.normal(kx, (batch, seq, hidden), dtype=jnp.float32)
    # The module initializes self_attn to ones; deterministic random values are
    # used here so the softmax/matmul path is non-trivially exercised.
    probes = jax.random.normal(kp, (n_probes, hidden), dtype=jnp.float32)

    out = mesh_probes(probes, x)
    out = jax.block_until_ready(out)

    ref = mesh_probes_ref(probes, x)
    assert out.shape == (batch, n_probes * hidden)
    # Exact-divide softmax => only residual difference is MXU f32 pass
    # precision vs the highest-precision XLA reference.
    assert jnp.allclose(out, ref, atol=1e-5, rtol=1e-4), "mismatch vs reference"

    print("KERNEL_OK")
</pallas_src>

<mosaic_0001>
module attributes {stable_mosaic.version = 11 : i64} {
  func.func @_mesh_probes_kernel(%arg0: i32, %arg1: memref<4x32xf32, #tpu.memory_space<vmem>>, %arg2: memref<2x8x32xf32, #tpu.memory_space<vmem>>, %arg3: memref<2x128xf32, #tpu.memory_space<vmem>>) attributes {dimension_semantics = [#tpu.dimension_semantics<parallel>], iteration_bounds = array<i64: 1>, scalar_prefetch = 0 : i64, scratch_operands = 0 : i64, tpu.core_type = #tpu.core_type<tc>, window_params = [{pipeline_mode = #tpu.pipeline_mode<synchronous>, transform_indices = @transform_0, window_bounds = array<i64: 4, 32>}, {transform_indices = @transform_1, window_bounds = array<i64: 2, 8, 32>}, {transform_indices = @transform_2, window_bounds = array<i64: 2, 128>}]} {
    %c0 = arith.constant 0 : index
    %c0_0 = arith.constant 0 : index
    %c0_1 = arith.constant 0 : index
    %0 = vector.load %arg2[%c0, %c0_0, %c0_1] : memref<2x8x32xf32, #tpu.memory_space<vmem>>, vector<2x8x32xf32>
    %c0_2 = arith.constant 0 : index
    %c0_3 = arith.constant 0 : index
    %1 = vector.load %arg1[%c0_2, %c0_3] : memref<4x32xf32, #tpu.memory_space<vmem>>, vector<4x32xf32>
    %2 = vector.shape_cast %0 : vector<2x8x32xf32> to vector<16x32xf32>
    %3 = tpu.transpose %1, [1, 0] : vector<4x32xf32> -> vector<32x4xf32>
    %cst = arith.constant dense<0.000000e+00> : vector<16x4xf32>
    %4 = tpu.matmul %2, %3, %cst {dimension_numbers = #tpu.dot_dimension_numbers<[1], [0], [0], [1], [0, 0, 1, 1], [], []>} : vector<16x32xf32>, vector<32x4xf32>, vector<16x4xf32> -> vector<16x4xf32>
    %5 = vector.shape_cast %4 : vector<16x4xf32> to vector<2x8x4xf32>
    %6 = tpu.transpose %5, [0, 2, 1] : vector<2x8x4xf32> -> vector<2x4x8xf32>
    %cst_4 = arith.constant dense<0xFF800000> : vector<2x4xf32>
    %7 = vector.multi_reduction <maximumf>, %6, %cst_4 [2] : vector<2x4x8xf32> to vector<2x4xf32>
    %8 = vector.shape_cast %7 : vector<2x4xf32> to vector<2x4x1xf32>
    %9 = vector.broadcast %8 : vector<2x4x1xf32> to vector<2x4x8xf32>
    %10 = arith.subf %6, %9 : vector<2x4x8xf32>
    %11 = math.exp %10 : vector<2x4x8xf32>
    %cst_5 = arith.constant dense<0.000000e+00> : vector<2x4xf32>
    %12 = vector.multi_reduction <add>, %11, %cst_5 [2] : vector<2x4x8xf32> to vector<2x4xf32>
    %13 = vector.shape_cast %12 : vector<2x4xf32> to vector<2x4x1xf32>
    %14 = vector.broadcast %13 : vector<2x4x1xf32> to vector<2x4x8xf32>
    %15 = arith.divf %11, %14 : vector<2x4x8xf32>
    "tpu.trace_start"() <{level = 10 : i32, message = "bps,bsh->bph"}> : () -> ()
    %cst_6 = arith.constant dense<0.000000e+00> : vector<2x4x32xf32>
    %16 = tpu.matmul %15, %0, %cst_6 {dimension_numbers = #tpu.dot_dimension_numbers<[2], [1], [1], [2], [0, 0, 0, 1, 1, 2], [0], [0]>} : vector<2x4x8xf32>, vector<2x8x32xf32>, vector<2x4x32xf32> -> vector<2x4x32xf32>
    "tpu.trace_stop"() : () -> ()
    %17 = vector.shape_cast %16 : vector<2x4x32xf32> to vector<2x128xf32>
    %c0_7 = arith.constant 0 : index
    %c0_8 = arith.constant 0 : index
    %18 = vector.load %arg3[%c0_7, %c0_8] : memref<2x128xf32, #tpu.memory_space<vmem>>, vector<2x128xf32>
    tpu.vector_store %arg3[%c0_7, %c0_8], %17 {strides = array<i32>} : memref<2x128xf32, #tpu.memory_space<vmem>>, vector<2x128xf32>,
    return
  }
  func.func @transform_0(%arg0: i32) -> (i32, i32) {
    %c0_i32 = arith.constant 0 : i32
    %c0_i32_0 = arith.constant 0 : i32
    %c0_i32_1 = arith.constant 0 : i32
    return %c0_i32, %c0_i32_0 : i32, i32
  }
  func.func @transform_1(%arg0: i32) -> (i32, i32, i32) {
    %c0_i32 = arith.constant 0 : i32
    %c0_i32_0 = arith.constant 0 : i32
    %c0_i32_1 = arith.constant 0 : i32
    return %arg0, %c0_i32, %c0_i32_0 : i32, i32, i32
  }
  func.func @transform_2(%arg0: i32) -> (i32, i32) {
    %c0_i32 = arith.constant 0 : i32
    %c0_i32_0 = arith.constant 0 : i32
    return %arg0, %c0_i32 : i32, i32
  }
}

</mosaic_0001>

<llo_original>
// kernel: tpu_custom_call.1
$region0: #{tpu_custom_call.1}
  #allocation0 [shape = 'u32[]', space=smem, size = 0x4, offset = 0x4, fixed_abs, tag = 'smem constant byte address 0x4 - core index']
  #allocation1 [shape = 'u32[144,128]{1,0:T(1,128)}', space=vmem, size = 0x12000, scoped, tag = 'internal scratch']
  %s0 = inlined_call_operand.hbm [shape: f32[4,32], index: 0, kind: input, shape index: {}]
  %s1 = inlined_call_operand.hbm [shape: f32[2,8,32], index: 1, kind: input, shape index: {}]
  %s2 = inlined_call_operand.hbm [shape: f32[2,128], index: 2, kind: output, shape index: {}]
  %s3 = sld [smem:[#allocation0]]
  $region26: #{tpu_custom_call.1} parent=0
    _
  %s5 = ssub.s32 1, %s3
  %s6 = scalar_select 0, %s5, %s3
  $region1: #{tpu_custom_call.1} parent=0
    #allocation2 [shape = 'u8[2048]{0}', space=vmem, size = 0x800, scoped, tag = 'input window, operand 0, single buffered']
    #allocation3 [shape = 's32[1]{0}', space=sflag, size = 0x4, scoped, tag = 'scoped memory for tpu_custom_call.1']
    #allocation4 [shape = 's32[1]{0}', space=sflag, size = 0x4, scoped, tag = 'scoped memory for tpu_custom_call.1']
    #allocation5 [shape = 'u8[8192]{0}', space=vmem, size = 0x2000, scoped, tag = 'input window, operand 1, single buffered']
    #allocation6 [shape = 's32[1]{0}', space=sflag, size = 0x4, scoped, tag = 'scoped memory for tpu_custom_call.1']
    #allocation7 [shape = 'u8[1024]{0}', space=vmem, size = 0x400, scoped, tag = 'output window, operand 0, single buffered']
    %7 = vsyncpa [#allocation3], 0
    %8 = vsyncpa [#allocation6], 0
    %9 = vsyncpa [#allocation4], 0
    // Predicated region
    $region2: #{tpu_custom_call.1} parent=1 // pred_check
      _
    $region3: #{tpu_custom_call.1} parent=1 // pred_check_branch
      %11 = sbr.rel (0) target = $region5
    $region4: #{tpu_custom_call.1} parent=1 // pred_region
      %s13 = ssub.s32 64, 64
      %14 = vsyncadd [#allocation3], %s13
      %s16 = sshll.u32 [#allocation2], 4
      %s17 = int_to_ptr.vmem [resolvable:$true] %s16
      %19 = dma.hbm_to_vmem [thread:$0]  %s0, 64, %s17, [#allocation3]
    $region5: #{tpu_custom_call.1} parent=1 // pred_fallthru
      _
    // Predicated region
    $region6: #{tpu_custom_call.1} parent=1 // pred_check
      _
    $region7: #{tpu_custom_call.1} parent=1 // pred_check_branch
      %21 = sbr.rel (0) target = $region9
    $region8: #{tpu_custom_call.1} parent=1 // pred_region
      %s23 = ssub.s32 256, 256
      %24 = vsyncadd [#allocation6], %s23
      %s25 = sshll.u32 [#allocation5], 4
      %s26 = int_to_ptr.vmem [resolvable:$true] %s25
      %31 = dma.hbm_to_vmem [thread:$0]  %s1, 256, %s26, [#allocation6], 128, 128, 8
    $region9: #{tpu_custom_call.1} parent=1 // pred_fallthru
      _
    // Predicated region
    $region10: #{tpu_custom_call.1} parent=1 // pred_check
      _
    $region11: #{tpu_custom_call.1} parent=1 // pred_check_branch
      %33 = sbr.rel (0) target = $region13
    $region12: #{tpu_custom_call.1} parent=1 // pred_region
      %34 = dma.done [#allocation3], 64
    $region13: #{tpu_custom_call.1} parent=1 // pred_fallthru
      _
    // Predicated region
    $region14: #{tpu_custom_call.1} parent=1 // pred_check
      _
    $region15: #{tpu_custom_call.1} parent=1 // pred_check_branch
      %36 = sbr.rel (0) target = $region17
    $region16: #{tpu_custom_call.1} parent=1 // pred_region
      %37 = dma.done [#allocation6], 256
    $region17: #{tpu_custom_call.1} parent=1 // pred_fallthru
      _
    %v38 = vld [vmem:[#allocation5] sm:$0xff]
    %v39 = vld [vmem:[#allocation5 + $0x8] sm:$0xff]
    %v40 = vld [vmem:[#allocation2] sm:$0xf]
    %vm41 = vcmask 261120
    %v43 = vsel %vm41, %v38, 0
    %v46 = vsel %vm41, %v39, 0
    %v49 = vsel %vm41, %v40, 0
    %51 = vmatprep.subr.mxu0 0.0
    %52 = vmatpush1.xpose.msra.mxu0 %v49
    %53 = vmatprep.subr.mxu0 0.0
    %54 = vmatpush1.xpose.msra.mxu0 0.0
    %55 = vmatprep.subr.mxu0 0.0
    %56 = vmatpush1.xpose.msra.mxu0 0.0
    %57 = vmatprep.subr.mxu0 0.0
    %58 = vmatpush1.xpose.msra.mxu0 0.0
    %59 = vmatprep.subr.mxu0 0.0
    %60 = vmatpush1.xpose.msra.mxu0 0.0
    %61 = vmatprep.subr.mxu0 0.0
    %62 = vmatpush1.xpose.msra.mxu0 0.0
    %63 = vmatprep.subr.mxu0 0.0
    %64 = vmatpush1.xpose.msra.mxu0 0.0
    %65 = vmatprep.subr.mxu0 0.0
    %66 = vmatpush1.xpose.msra.mxu0 0.0
    %67 = vmatprep.subr.mxu0 0.0
    %68 = vmatpush1.xpose.msra.mxu0 0.0
    %69 = vmatprep.subr.mxu0 0.0
    %70 = vmatpush1.xpose.msra.mxu0 0.0
    %71 = vmatprep.subr.mxu0 0.0
    %72 = vmatpush1.xpose.msra.mxu0 0.0
    %73 = vmatprep.subr.mxu0 0.0
    %74 = vmatpush1.xpose.msra.mxu0 0.0
    %75 = vmatprep.subr.mxu0 0.0
    %76 = vmatpush1.xpose.msra.mxu0 0.0
    %77 = vmatprep.subr.mxu0 0.0
    %78 = vmatpush1.xpose.msra.mxu0 0.0
    %79 = vmatprep.subr.mxu0 0.0
    %80 = vmatpush1.xpose.msra.mxu0 0.0
    %81 = vmatprep.subr.mxu0 0.0
    %82 = vmatpush1.xpose.msra.mxu0 0.0
    %83 = vmatprep.subr.mxu0 0.0
    %84 = vmatpush1.xpose.msra.mxu0 0.0
    %85 = vmatprep.subr.mxu0 0.0
    %86 = vmatpush1.xpose.msra.mxu0 0.0
    %87 = vmatprep.subr.mxu0 0.0
    %88 = vmatpush1.xpose.msra.mxu0 0.0
    %89 = vmatprep.subr.mxu0 0.0
    %90 = vmatpush1.xpose.msra.mxu0 0.0
    %91 = vmatprep.subr.mxu0 0.0
    %92 = vmatpush1.xpose.msra.mxu0 0.0
    %93 = vmatprep.subr.mxu0 0.0
    %94 = vmatpush1.xpose.msra.mxu0 0.0
    %95 = vmatprep.subr.mxu0 0.0
    %96 = vmatpush1.xpose.msra.mxu0 0.0
    %97 = vmatprep.subr.mxu0 0.0
    %98 = vmatpush1.xpose.msra.mxu0 0.0
    %99 = vmatprep.subr.mxu0 0.0
    %100 = vmatpush1.xpose.msra.mxu0 0.0
    %101 = vmatprep.subr.mxu0 0.0
    %102 = vmatpush1.xpose.msra.mxu0 0.0
    %103 = vmatprep.subr.mxu0 0.0
    %104 = vmatpush1.xpose.msra.mxu0 0.0
    %105 = vmatprep.subr.mxu0 0.0
    %106 = vmatpush1.xpose.msra.mxu0 0.0
    %107 = vmatprep.subr.mxu0 0.0
    %108 = vmatpush1.xpose.msra.mxu0 0.0
    %109 = vmatprep.subr.mxu0 0.0
    %110 = vmatpush1.xpose.msra.mxu0 0.0
    %111 = vmatprep.subr.mxu0 0.0
    %112 = vmatpush1.xpose.msra.mxu0 0.0
    %113 = vmatprep.subr.mxu0 0.0
    %114 = vmatpush1.xpose.msra.mxu0 0.0
    %115 = vmatprep.mubr.f32.mxu0 0.0
    %116 = vmatmul.mubr.f32.gmra.mrb[0].mxu0 %v43
    %v117 = vpop.f32.mrb[0].mxu0
    %v118 = vadd.f32 0.0, %v117
    %v119 = vpop.f32.mrb[0].mxu0
    %120 = vmatprep.mubr.f32.mxu0 0.0
    %121 = vmatmul.mubr.f32.gmra.mrb[0].mxu0 %v46
    %v122 = vpop.f32.mrb[0].mxu0
    %v123 = vadd.f32 0.0, %v122
    %v124 = vpop.f32.mrb[0].mxu0
    %125 = vdwg.mxu0
    %126 = vxpose.xlu0.b32.start [1/16] %v118, 128
    %127 = vxpose.xlu0.b32.cont [2/16] 0.0, 128
    %128 = vxpose.xlu0.b32.cont [3/16] 0.0, 128
    %129 = vxpose.xlu0.b32.cont [4/16] 0.0, 128
    %130 = vxpose.xlu0.b32.cont [5/16] 0.0, 128
    %131 = vxpose.xlu0.b32.cont [6/16] 0.0, 128
    %132 = vxpose.xlu0.b32.cont [7/16] 0.0, 128
    %133 = vxpose.xlu0.b32.cont [8/16] 0.0, 128
    %134 = vxpose.xlu0.b32.cont [9/16] 0.0, 128
    %135 = vxpose.xlu0.b32.cont [10/16] 0.0, 128
    %136 = vxpose.xlu0.b32.cont [11/16] 0.0, 128
    %137 = vxpose.xlu0.b32.cont [12/16] 0.0, 128
    %138 = vxpose.xlu0.b32.cont [13/16] 0.0, 128
    %139 = vxpose.xlu0.b32.cont [14/16] 0.0, 128
    %140 = vxpose.xlu0.b32.cont [15/16] 0.0, 128
    %141 = vxpose.xlu0.b32.end [16/16] 0.0, 128
    %v142 = vpop.trf.xlu0
    %v143 = vpop.trf.xlu0
    %v144 = vpop.trf.xlu0
    %v145 = vpop.trf.xlu0
    %v146 = vpop.trf.xlu0
    %v147 = vpop.trf.xlu0
    %v148 = vpop.trf.xlu0
    %v149 = vpop.trf.xlu0
    %v150 = vpop.trf.xlu0
    %v151 = vpop.trf.xlu0
    %v152 = vpop.trf.xlu0
    %v153 = vpop.trf.xlu0
    %v154 = vpop.trf.xlu0
    %v155 = vpop.trf.xlu0
    %v156 = vpop.trf.xlu0
    %v157 = vpop.trf.xlu0
    %158 = vxpose.xlu0.b32.start [1/16] %v123, 128
    %159 = vxpose.xlu0.b32.cont [2/16] 0.0, 128
    %160 = vxpose.xlu0.b32.cont [3/16] 0.0, 128
    %161 = vxpose.xlu0.b32.cont [4/16] 0.0, 128
    %162 = vxpose.xlu0.b32.cont [5/16] 0.0, 128
    %163 = vxpose.xlu0.b32.cont [6/16] 0.0, 128
    %164 = vxpose.xlu0.b32.cont [7/16] 0.0, 128
    %165 = vxpose.xlu0.b32.cont [8/16] 0.0, 128
    %166 = vxpose.xlu0.b32.cont [9/16] 0.0, 128
    %167 = vxpose.xlu0.b32.cont [10/16] 0.0, 128
    %168 = vxpose.xlu0.b32.cont [11/16] 0.0, 128
    %169 = vxpose.xlu0.b32.cont [12/16] 0.0, 128
    %170 = vxpose.xlu0.b32.cont [13/16] 0.0, 128
    %171 = vxpose.xlu0.b32.cont [14/16] 0.0, 128
    %172 = vxpose.xlu0.b32.cont [15/16] 0.0, 128
    %173 = vxpose.xlu0.b32.end [16/16] 0.0, 128
    %v174 = vpop.trf.xlu0
    %v175 = vpop.trf.xlu0
    %v176 = vpop.trf.xlu0
    %v177 = vpop.trf.xlu0
    %v178 = vpop.trf.xlu0
    %v179 = vpop.trf.xlu0
    %v180 = vpop.trf.xlu0
    %v181 = vpop.trf.xlu0
    %v182 = vpop.trf.xlu0
    %v183 = vpop.trf.xlu0
    %v184 = vpop.trf.xlu0
    %v185 = vpop.trf.xlu0
    %v186 = vpop.trf.xlu0
    %v187 = vpop.trf.xlu0
    %v188 = vpop.trf.xlu0
    %v189 = vpop.trf.xlu0
    %vm190 = vcmask 60416
    %v191 = vsel %vm190, %v142, -inf
    %192 = vmax.xlane.f32.xlu0 %v191
    %v193 = vpop.xlane.xlu0 %192
    %v194 = vsel %vm190, %v174, -inf
    %195 = vmax.xlane.f32.xlu0 %v194
    %v196 = vpop.xlane.xlu0 %195
    %v197 = vsub.f32 %v142, %v193
    %v198 = vsub.f32 %v174, %v196
    %v199 = vmul.f32 %v197, 1.442695
    %v200 = vpow.pop %v199
    %v201 = vmul.f32 %v198, 1.442695
    %v202 = vpow.pop %v201
    %v203 = vsel %vm190, %v200, 0.0
    %204 = vadd.xlane.f32.xlu0 %v203
    %v205 = vpop.xlane.xlu0 %204
    %v206 = vsel %vm190, %v202, 0.0
    %207 = vadd.xlane.f32.xlu0 %v206
    %v208 = vpop.xlane.xlu0 %207
    %v209 = vrcp.pop %v205
    %v210 = vmul.f32 %v200, %v209
    %v211 = vrcp.pop %v208
    %v212 = vmul.f32 %v202, %v211
    %vm213 = vcmask 64512
    %v215 = vsel %vm213, %v210, 0
    %217 = vmatprep.subr.mxu0 0.0
    %218 = vmatpush1.msra.mxu0 %v38
    %219 = vmatprep.subr.mxu0 0.0
    %220 = vmatpush1.msra.mxu0 0.0
    %221 = vmatprep.subr.mxu0 0.0
    %222 = vmatpush1.msra.mxu0 0.0
    %223 = vmatprep.subr.mxu0 0.0
    %224 = vmatpush1.msra.mxu0 0.0
    %225 = vmatprep.subr.mxu0 0.0
    %226 = vmatpush1.msra.mxu0 0.0
    %227 = vmatprep.subr.mxu0 0.0
    %228 = vmatpush1.msra.mxu0 0.0
    %229 = vmatprep.subr.mxu0 0.0
    %230 = vmatpush1.msra.mxu0 0.0
    %231 = vmatprep.subr.mxu0 0.0
    %232 = vmatpush1.msra.mxu0 0.0
    %233 = vmatprep.subr.mxu0 0.0
    %234 = vmatpush1.msra.mxu0 0.0
    %235 = vmatprep.subr.mxu0 0.0
    %236 = vmatpush1.msra.mxu0 0.0
    %237 = vmatprep.subr.mxu0 0.0
    %238 = vmatpush1.msra.mxu0 0.0
    %239 = vmatprep.subr.mxu0 0.0
    %240 = vmatpush1.msra.mxu0 0.0
    %241 = vmatprep.subr.mxu0 0.0
    %242 = vmatpush1.msra.mxu0 0.0
    %243 = vmatprep.subr.mxu0 0.0
    %244 = vmatpush1.msra.mxu0 0.0
    %245 = vmatprep.subr.mxu0 0.0
    %246 = vmatpush1.msra.mxu0 0.0
    %247 = vmatprep.subr.mxu0 0.0
    %248 = vmatpush1.msra.mxu0 0.0
    %249 = vmatprep.subr.mxu0 0.0
    %250 = vmatpush1.msra.mxu0 0.0
    %251 = vmatprep.subr.mxu0 0.0
    %252 = vmatpush1.msra.mxu0 0.0
    %253 = vmatprep.subr.mxu0 0.0
    %254 = vmatpush1.msra.mxu0 0.0
    %255 = vmatprep.subr.mxu0 0.0
    %256 = vmatpush1.msra.mxu0 0.0
    %257 = vmatprep.subr.mxu0 0.0
    %258 = vmatpush1.msra.mxu0 0.0
    %259 = vmatprep.subr.mxu0 0.0
    %260 = vmatpush1.msra.mxu0 0.0
    %261 = vmatprep.subr.mxu0 0.0
    %262 = vmatpush1.msra.mxu0 0.0
    %263 = vmatprep.subr.mxu0 0.0
    %264 = vmatpush1.msra.mxu0 0.0
    %265 = vmatprep.subr.mxu0 0.0
    %266 = vmatpush1.msra.mxu0 0.0
    %267 = vmatprep.subr.mxu0 0.0
    %268 = vmatpush1.msra.mxu0 0.0
    %269 = vmatprep.subr.mxu0 0.0
    %270 = vmatpush1.msra.mxu0 0.0
    %271 = vmatprep.subr.mxu0 0.0
    %272 = vmatpush1.msra.mxu0 0.0
    %273 = vmatprep.subr.mxu0 0.0
    %274 = vmatpush1.msra.mxu0 0.0
    %275 = vmatprep.subr.mxu0 0.0
    %276 = vmatpush1.msra.mxu0 0.0
    %277 = vmatprep.subr.mxu0 0.0
    %278 = vmatpush1.msra.mxu0 0.0
    %279 = vmatprep.subr.mxu0 0.0
    %280 = vmatpush1.msra.mxu0 0.0
    %281 = vmatprep.mubr.f32.mxu0 0.0
    %282 = vmatmul.mubr.f32.gmra.mrb[0].mxu0 %v215
    %v283 = vpop.f32.mrb[0].mxu0
    %v284 = vadd.f32 0.0, %v283
    %v285 = vpop.f32.mrb[0].mxu0
    %286 = vdwg.mxu0
    %v288 = vsel %vm213, %v212, 0
    %290 = vmatprep.subr.mxu0 0.0
    %291 = vmatpush1.msra.mxu0 %v39
    %292 = vmatprep.subr.mxu0 0.0
    %293 = vmatpush1.msra.mxu0 0.0
    %294 = vmatprep.subr.mxu0 0.0
    %295 = vmatpush1.msra.mxu0 0.0
    %296 = vmatprep.subr.mxu0 0.0
    %297 = vmatpush1.msra.mxu0 0.0
    %298 = vmatprep.subr.mxu0 0.0
    %299 = vmatpush1.msra.mxu0 0.0
    %300 = vmatprep.subr.mxu0 0.0
    %301 = vmatpush1.msra.mxu0 0.0
    %302 = vmatprep.subr.mxu0 0.0
    %303 = vmatpush1.msra.mxu0 0.0
    %304 = vmatprep.subr.mxu0 0.0
    %305 = vmatpush1.msra.mxu0 0.0
    %306 = vmatprep.subr.mxu0 0.0
    %307 = vmatpush1.msra.mxu0 0.0
    %308 = vmatprep.subr.mxu0 0.0
    %309 = vmatpush1.msra.mxu0 0.0
    %310 = vmatprep.subr.mxu0 0.0
    %311 = vmatpush1.msra.mxu0 0.0
    %312 = vmatprep.subr.mxu0 0.0
    %313 = vmatpush1.msra.mxu0 0.0
    %314 = vmatprep.subr.mxu0 0.0
    %315 = vmatpush1.msra.mxu0 0.0
    %316 = vmatprep.subr.mxu0 0.0
    %317 = vmatpush1.msra.mxu0 0.0
    %318 = vmatprep.subr.mxu0 0.0
    %319 = vmatpush1.msra.mxu0 0.0
    %320 = vmatprep.subr.mxu0 0.0
    %321 = vmatpush1.msra.mxu0 0.0
    %322 = vmatprep.subr.mxu0 0.0
    %323 = vmatpush1.msra.mxu0 0.0
    %324 = vmatprep.subr.mxu0 0.0
    %325 = vmatpush1.msra.mxu0 0.0
    %326 = vmatprep.subr.mxu0 0.0
    %327 = vmatpush1.msra.mxu0 0.0
    %328 = vmatprep.subr.mxu0 0.0
    %329 = vmatpush1.msra.mxu0 0.0
    %330 = vmatprep.subr.mxu0 0.0
    %331 = vmatpush1.msra.mxu0 0.0
    %332 = vmatprep.subr.mxu0 0.0
    %333 = vmatpush1.msra.mxu0 0.0
    %334 = vmatprep.subr.mxu0 0.0
    %335 = vmatpush1.msra.mxu0 0.0
    %336 = vmatprep.subr.mxu0 0.0
    %337 = vmatpush1.msra.mxu0 0.0
    %338 = vmatprep.subr.mxu0 0.0
    %339 = vmatpush1.msra.mxu0 0.0
    %340 = vmatprep.subr.mxu0 0.0
    %341 = vmatpush1.msra.mxu0 0.0
    %342 = vmatprep.subr.mxu0 0.0
    %343 = vmatpush1.msra.mxu0 0.0
    %344 = vmatprep.subr.mxu0 0.0
    %345 = vmatpush1.msra.mxu0 0.0
    %346 = vmatprep.subr.mxu0 0.0
    %347 = vmatpush1.msra.mxu0 0.0
    %348 = vmatprep.subr.mxu0 0.0
    %349 = vmatpush1.msra.mxu0 0.0
    %350 = vmatprep.subr.mxu0 0.0
    %351 = vmatpush1.msra.mxu0 0.0
    %352 = vmatprep.subr.mxu0 0.0
    %353 = vmatpush1.msra.mxu0 0.0
    %354 = vmatprep.mubr.f32.mxu0 0.0
    %355 = vmatmul.mubr.f32.gmra.mrb[0].mxu0 %v288
    %v356 = vpop.f32.mrb[0].mxu0
    %v357 = vadd.f32 0.0, %v356
    %v358 = vpop.f32.mrb[0].mxu0
    %359 = vdwg.mxu0
    %v361 = vunpack.c.l.s4 1983009808
    %v362 = vunpack.c.0.s8 %v361
    %v363 = vlaneseq
    %v364 = vshrl.u32 %v363, 7
    %v365 = vsub.s32 %v362, %v364
    %v366 = vrot.slane %v284, %v365
    %v368 = vunpack.c.l.s4 1983009808
    %v369 = vunpack.c.0.s8 %v368
    %v370 = vlaneseq
    %v371 = vshrl.u32 %v370, 7
    %v372 = vsub.s32 %v369, %v371
    %v373 = vrot.slane %v357, %v372
    %v374 = vcombine.low %v366, %v373
    %v375 = vcombine.high %v366, %v373
    %v377 = vunpack.c.l.s4 1934713408
    %v378 = vunpack.c.0.s8 %v377
    %v379 = vlaneseq
    %v380 = vshrl.u32 %v379, 7
    %v381 = vsub.s32 %v378, %v380
    %v382 = vrot.slane %v374, %v381
    %v384 = vunpack.c.l.s4 1934713408
    %v385 = vunpack.c.0.s8 %v384
    %v386 = vlaneseq
    %v387 = vshrl.u32 %v386, 7
    %v388 = vsub.s32 %v385, %v387
    %v389 = vrot.slane %v375, %v388
    %v390 = vcombine.high %v382, 0.0
    %v391 = vcombine.high %v389, 0.0
    %393 = vrot.lane.b32.xlu0 %v390, 32
    %v394 = vpop.permute.xlu0 %393
    %397 = vrot.lane.b32.xlu0 %v389, 64
    %v398 = vpop.permute.xlu0 %397
    %401 = vrot.lane.b32.xlu0 %v391, 96
    %v402 = vpop.permute.xlu0 %401
    %v404 = vsel %vm41, %v382, %v394
    %vm405 = vcmask 523264
    %v406 = vsel %vm405, %v404, %v398
    %vm407 = vcmask 785408
    %v408 = vsel %vm407, %v406, %v402
    %409 = vst [vmem:[#allocation7] sm:$0x3] %v408
    // Predicated region
    $region18: #{tpu_custom_call.1} parent=1 // pred_check
      _
    $region19: #{tpu_custom_call.1} parent=1 // pred_check_branch
      %411 = sbr.rel (0) target = $region21
    $region20: #{tpu_custom_call.1} parent=1 // pred_region
      %s413 = ssub.s32 32, 32
      %414 = vsyncadd [#allocation4], %s413
      %s416 = sshll.u32 [#allocation7], 4
      %s417 = int_to_ptr.vmem [resolvable:$true] %s416
      %419 = dma.vmem_to_hbm [thread:$0]  %s417, 32, %s2, [#allocation4]
    $region21: #{tpu_custom_call.1} parent=1 // pred_fallthru
      _
    // Predicated region
    $region22: #{tpu_custom_call.1} parent=1 // pred_check
      _
    $region23: #{tpu_custom_call.1} parent=1 // pred_check_branch
      %421 = sbr.rel (0) target = $region25
    $region24: #{tpu_custom_call.1} parent=1 // pred_region
      %422 = dma.done [#allocation4], 32
    $region25: #{tpu_custom_call.1} parent=1 // pred_fallthru
      _
    %423 = vsyncpa [#allocation3], 1
    %424 = vsyncpa [#allocation6], 1
    %425 = vsyncpa [#allocation4], 1

</llo_original>
